<compile_context>
chip_gen: v7x
topology: tpu7x:2x2x1
jax: 0.10.0
libtpu: 0.0.40
codegen_flags: <defaults>
</compile_context>

<pallas_src>
import functools

import jax
import jax.numpy as jnp
from jax.experimental import pallas as pl
from jax.experimental.pallas import tpu as pltpu

LANES = 128
ACC_ROWS = 64  # parallel accumulator rows (32 KiB f32 scratch)


def _cdiv(a, b):
    return (a + b - 1) // b


def _round_up(x, m):
    return ((x + m - 1) // m) * m


def _sublane_align(dtype):
    # f32 -> 8, bf16/fp16 -> 16, int8/fp8 -> 32 (sublane packing).
    itemsize = jnp.dtype(dtype).itemsize
    return 8 * max(1, 4 // max(1, itemsize))


def _device_tiling():
    """Returns (default block rows, tensorcores to split across, vmem limit)."""
    try:
        kind = jax.devices()[0].device_kind.lower()
    except Exception:
        kind = ""
    if "v7" in kind:
        # 3.2 TB/s HBM: 4 MiB f32 blocks amortize the ~0.35us/step overhead to
        # ~12%; 2 inputs x 2 buffers x 4 MiB = 16 MiB, give headroom for
        # intermediates with an explicit 48 MiB limit (64 MiB physical per TC).
        return 8192, 2, 48 << 20
    if "v5" in kind:
        # ~0.82 TB/s HBM: 1 MiB blocks already ~88% efficient and the 16 MiB
        # scoped-VMEM default leaves little headroom for bigger tiles.
        return 2048, 1, None
    # v6e and safe fallback: 2 MiB blocks (8 MiB double-buffered).
    return 4096, 1, None


def _huber_kernel(y_ref, yhat_ref, o_ref, acc_ref, *, delta, rows,
                  block_rows, acc_rows, steps_per_split, needs_mask):
    j = pl.program_id(1)

    # Zero the vector accumulators at the start of each split's reduction loop.
    @pl.when(j == 0)
    def _():
        acc_ref[...] = jnp.zeros_like(acc_ref)

    y = y_ref[...].astype(jnp.float32)
    y_hat = yhat_ref[...].astype(jnp.float32)
    residual = jnp.abs(y - y_hat)
    # Branch-free Huber: 0.5*r^2 for r < delta, delta*r - 0.5*delta^2 otherwise.
    clipped = jnp.minimum(residual, delta)
    loss = clipped * (residual - 0.5 * clipped)

    def fold(v):
        # Fold the block into acc_rows parallel accumulator rows: pure VPU adds
        # with a short (block_rows/acc_rows) dependence chain, no XLU in loop.
        return jnp.sum(v.reshape(block_rows // acc_rows, acc_rows, LANES),
                       axis=0)

    if needs_mask:
        # Runtime-gated mask: only the block that straddles `rows` (or a
        # clamped duplicate block on the last split) pays for iota+select.
        i = pl.program_id(0)
        # NOTE: must be the UNCLAMPED logical offset so a clamped duplicate
        # block (re-read of the last real block) is fully zeroed; jnp.where is
        # a select, so garbage/NaN in over-read rows cannot leak.
        row_offset = (i * steps_per_split + j) * block_rows
        is_full = row_offset + block_rows <= rows

        @pl.when(is_full)
        def _():
            acc_ref[...] += fold(loss)

        @pl.when(jnp.logical_not(is_full))
        def _():
            row_ids = row_offset + jax.lax.broadcasted_iota(
                jnp.int32, (block_rows, LANES), 0)
            acc_ref[...] += fold(jnp.where(row_ids < rows, loss, 0.0))
    else:
        acc_ref[...] += fold(loss)

    # Finalize this split: one sublane reduce -> lane-dense (1, 128) row.
    @pl.when(j == pl.num_programs(1) - 1)
    def _():
        o_ref[...] = jnp.sum(acc_ref[...], axis=0, keepdims=True)


def huber_loss(y, y_hat, delta=1.0):
    assert y.shape == y_hat.shape
    n = y.size
    assert n > 0

    y_flat = y.reshape(-1)
    yhat_flat = y_hat.reshape(-1)

    # Pad only when the element count is not lane-aligned (zero pads in both
    # inputs -> residual 0 -> zero loss contribution).
    n_pad = (-n) % LANES
    if n_pad:
        y_flat = jnp.pad(y_flat, (0, n_pad))
        yhat_flat = jnp.pad(yhat_flat, (0, n_pad))
    rows = (n + n_pad) // LANES

    y2 = y_flat.reshape(rows, LANES)        # keep native dtype; cast in-kernel
    yhat2 = yhat_flat.reshape(rows, LANES)

    default_block_rows, n_cores, vmem_limit = _device_tiling()
    align = max(_sublane_align(y2.dtype), _sublane_align(yhat2.dtype))

    if rows >= ACC_ROWS:
        # Multiples of ACC_ROWS(=64) are automatically multiples of the 8/16/32
        # sublane packing of any supported dtype.
        block_rows = min(default_block_rows, _round_up(rows, ACC_ROWS))
        acc_rows = ACC_ROWS
    else:
        block_rows = _round_up(rows, align)
        acc_rows = block_rows

    total_steps = _cdiv(rows, block_rows)
    n_splits = n_cores if (n_cores > 1 and total_steps >= n_cores) else 1
    steps_per_split = _cdiv(total_steps, n_splits)

    # Masking needed iff the grid covers more rows than the array has
    # (ragged last block and/or clamped duplicate block on the last split).
    needs_mask = (n_splits * steps_per_split * block_rows) != rows
    needs_clamp = (n_splits * steps_per_split) > total_steps

    def in_map(i, j):
        blk = i * steps_per_split + j
        if needs_clamp:
            blk = jnp.minimum(blk, total_steps - 1)  # duplicate is masked out
        return (blk, 0)

    kernel = functools.partial(
        _huber_kernel,
        delta=float(delta),
        rows=rows,
        block_rows=block_rows,
        acc_rows=acc_rows,
        steps_per_split=steps_per_split,
        needs_mask=needs_mask,
    )

    grid_spec = pltpu.PrefetchScalarGridSpec(
        num_scalar_prefetch=0,
        grid=(n_splits, steps_per_split),
        in_specs=[
            pl.BlockSpec((block_rows, LANES), in_map),
            pl.BlockSpec((block_rows, LANES), in_map),
        ],
        out_specs=pl.BlockSpec((1, LANES), lambda i, j: (i, 0)),
        scratch_shapes=[pltpu.VMEM((acc_rows, LANES), jnp.float32)],
    )

    def build(semantics):
        return pl.pallas_call(
            kernel,
            out_shape=jax.ShapeDtypeStruct((n_splits, LANES), jnp.float32),
            grid_spec=grid_spec,
            compiler_params=pltpu.CompilerParams(
                dimension_semantics=semantics,
                vmem_limit_bytes=vmem_limit,
            ),
        )

    # On 2-TC chips (v7x) ask for core-level sharding of the split axis so each
    # TC streams its own half of the rows; fall back to plain "parallel" if
    # core-level semantics are not supported by the installed compiler.
    if n_splits == 2:
        semantics_options = [(pltpu.CORE_PARALLEL, pltpu.ARBITRARY),
                             ("parallel", "arbitrary")]
    else:
        semantics_options = [("parallel", "arbitrary")]

    partials = None
    last_err = None
    for sem in semantics_options:
        try:
            partials = build(sem)(y2, yhat2)
            break
        except Exception as e:  # noqa: BLE001 - fall back to next semantics
            last_err = e
    if partials is None:
        raise last_err

    # Tiny final cross-lane reduce + mean over the *original* element count.
    # TODO(synk): could be folded into the kernel's last step (low priority).
    return jnp.sum(partials) * (1.0 / float(n))


def huber_loss_ref(y, y_hat, delta=1.0):
    y = y.astype(jnp.float32)
    y_hat = y_hat.astype(jnp.float32)
    residual = jnp.abs(y - y_hat)
    loss = jnp.where(
        residual < delta,
        0.5 * residual**2,
        delta * residual - 0.5 * delta**2,
    )
    return jnp.mean(loss)


if __name__ == "__main__":
    key = jax.random.PRNGKey(0)

    # Primary check: small NCHW-like tensor (lane-aligned, single block).
    k1, k2 = jax.random.split(key)
    shape = (2, 4, 16, 16)  # 2048 elements
    y = jax.random.normal(k1, shape, dtype=jnp.float32)
    y_hat = jax.random.normal(k2, shape, dtype=jnp.float32)
    out = jax.block_until_ready(huber_loss(y, y_hat, delta=1.0))
    ref = huber_loss_ref(y, y_hat, delta=1.0)
    assert jnp.allclose(out, ref, atol=1e-5, rtol=1e-5), (out, ref)

    # Ragged element count (exercises the gated in-kernel mask branch).
    k3, k4 = jax.random.split(k1)
    shape2 = (3, 5, 7)  # 105 elements, not lane-aligned
    y2 = jax.random.normal(k3, shape2, dtype=jnp.float32)
    y_hat2 = jax.random.normal(k4, shape2, dtype=jnp.float32)
    out2 = jax.block_until_ready(huber_loss(y2, y_hat2, delta=0.75))
    ref2 = huber_loss_ref(y2, y_hat2, delta=0.75)
    assert jnp.allclose(out2, ref2, atol=1e-5, rtol=1e-5), (out2, ref2)

    # Multi-block grid path (multi-step reduction on every generation).
    k5, k6 = jax.random.split(k2)
    shape3 = (32, 16, 64, 64)  # 2,097,152 elements -> rows = 16384
    y3 = jax.random.normal(k5, shape3, dtype=jnp.float32)
    y_hat3 = jax.random.normal(k6, shape3, dtype=jnp.float32)
    out3 = jax.block_until_ready(huber_loss(y3, y_hat3, delta=1.0))
    ref3 = huber_loss_ref(y3, y_hat3, delta=1.0)
    assert jnp.allclose(out3, ref3, atol=1e-5, rtol=1e-4), (out3, ref3)

    # Narrow-dtype path: bf16 inputs stream in bf16, cast to f32 per tile.
    k7, k8 = jax.random.split(k3)
    shape4 = (4, 8, 32, 32)  # 32768 elements -> rows = 256
    y4 = jax.random.normal(k7, shape4, dtype=jnp.bfloat16)
    y_hat4 = jax.random.normal(k8, shape4, dtype=jnp.bfloat16)
    out4 = jax.block_until_ready(huber_loss(y4, y_hat4, delta=1.0))
    ref4 = huber_loss_ref(y4, y_hat4, delta=1.0)
    assert jnp.allclose(out4, ref4, atol=1e-5, rtol=1e-4), (out4, ref4)

    print("KERNEL_OK")
</pallas_src>

<mosaic_0001>
module attributes {stable_mosaic.version = 11 : i64} {
  func.func @_huber_kernel(%arg0: i32, %arg1: i32, %arg2: memref<16x128xf32, #tpu.memory_space<vmem>>, %arg3: memref<16x128xf32, #tpu.memory_space<vmem>>, %arg4: memref<1x128xf32, #tpu.memory_space<vmem>>, %arg5: memref<16x128xf32, #tpu.memory_space<vmem>>) attributes {dimension_semantics = [#tpu.dimension_semantics<parallel>, #tpu.dimension_semantics<arbitrary>], iteration_bounds = array<i64: 1, 1>, scalar_prefetch = 0 : i64, scratch_operands = 1 : i64, tpu.core_type = #tpu.core_type<tc>, window_params = [{transform_indices = @transform_0, window_bounds = array<i64: 16, 128>}, {transform_indices = @transform_1, window_bounds = array<i64: 16, 128>}, {transform_indices = @transform_2, window_bounds = array<i64: 1, 128>}]} {
    %c0_i32 = arith.constant 0 : i32
    %0 = arith.cmpi eq, %arg1, %c0_i32 : i32
    %1 = arith.extui %0 : i1 to i32
    %c0_i32_0 = arith.constant 0 : i32
    %2 = arith.cmpi ne, %1, %c0_i32_0 : i32
    scf.if %2 {
      %cst_12 = arith.constant 0.000000e+00 : f32
      %21 = vector.broadcast %cst_12 : f32 to vector<16x128xf32>
      %c0_13 = arith.constant 0 : index
      %c0_14 = arith.constant 0 : index
      %22 = vector.load %arg5[%c0_13, %c0_14] : memref<16x128xf32, #tpu.memory_space<vmem>>, vector<16x128xf32>
      tpu.vector_store %arg5[%c0_13, %c0_14], %21 {strides = array<i32>} : memref<16x128xf32, #tpu.memory_space<vmem>>, vector<16x128xf32>,
    } else {
    }
    %c0 = arith.constant 0 : index
    %c0_1 = arith.constant 0 : index
    %3 = vector.load %arg2[%c0, %c0_1] : memref<16x128xf32, #tpu.memory_space<vmem>>, vector<16x128xf32>
    %c0_2 = arith.constant 0 : index
    %c0_3 = arith.constant 0 : index
    %4 = vector.load %arg3[%c0_2, %c0_3] : memref<16x128xf32, #tpu.memory_space<vmem>>, vector<16x128xf32>
    %5 = arith.subf %3, %4 : vector<16x128xf32>
    %6 = math.absf %5 : vector<16x128xf32>
    %cst = arith.constant 1.000000e+00 : f32
    %7 = vector.broadcast %cst : f32 to vector<16x128xf32>
    %8 = arith.minimumf %6, %7 : vector<16x128xf32>
    %cst_4 = arith.constant 5.000000e-01 : f32
    %9 = vector.broadcast %cst_4 : f32 to vector<16x128xf32>
    %10 = arith.mulf %9, %8 : vector<16x128xf32>
    %11 = arith.subf %6, %10 : vector<16x128xf32>
    %12 = arith.mulf %8, %11 : vector<16x128xf32>
    %c0_5 = arith.constant 0 : index
    %c0_6 = arith.constant 0 : index
    %13 = vector.load %arg5[%c0_5, %c0_6] : memref<16x128xf32, #tpu.memory_space<vmem>>, vector<16x128xf32>
    %14 = vector.shape_cast %12 : vector<16x128xf32> to vector<1x16x128xf32>
    %cst_7 = arith.constant dense<0.000000e+00> : vector<16x128xf32>
    %15 = vector.multi_reduction <add>, %14, %cst_7 [0] : vector<1x16x128xf32> to vector<16x128xf32>
    %16 = arith.addf %13, %15 : vector<16x128xf32>
    %c0_8 = arith.constant 0 : index
    %c0_9 = arith.constant 0 : index
    %17 = vector.load %arg5[%c0_8, %c0_9] : memref<16x128xf32, #tpu.memory_space<vmem>>, vector<16x128xf32>
    tpu.vector_store %arg5[%c0_8, %c0_9], %16 {strides = array<i32>} : memref<16x128xf32, #tpu.memory_space<vmem>>, vector<16x128xf32>,
    %c0_i32_10 = arith.constant 0 : i32
    %18 = arith.cmpi eq, %arg1, %c0_i32_10 : i32
    %19 = arith.extui %18 : i1 to i32
    %c0_i32_11 = arith.constant 0 : i32
    %20 = arith.cmpi ne, %19, %c0_i32_11 : i32
    scf.if %20 {
      %c0_12 = arith.constant 0 : index
      %c0_13 = arith.constant 0 : index
      %21 = vector.load %arg5[%c0_12, %c0_13] : memref<16x128xf32, #tpu.memory_space<vmem>>, vector<16x128xf32>
      %cst_14 = arith.constant dense<0.000000e+00> : vector<128xf32>
      %22 = vector.multi_reduction <add>, %21, %cst_14 [0] : vector<16x128xf32> to vector<128xf32>
      %23 = vector.shape_cast %22 : vector<128xf32> to vector<1x128xf32>
      %c0_15 = arith.constant 0 : index
      %c0_16 = arith.constant 0 : index
      %24 = vector.load %arg4[%c0_15, %c0_16] : memref<1x128xf32, #tpu.memory_space<vmem>>, vector<1x128xf32>
      tpu.vector_store %arg4[%c0_15, %c0_16], %23 {strides = array<i32>} : memref<1x128xf32, #tpu.memory_space<vmem>>, vector<1x128xf32>,
    } else {
    }
    return
  }
  func.func @transform_0(%arg0: i32, %arg1: i32) -> (i32, i32) {
    %c1_i32 = arith.constant 1 : i32
    %0 = arith.muli %arg0, %c1_i32 : i32
    %1 = arith.addi %0, %arg1 : i32
    %c0_i32 = arith.constant 0 : i32
    %c0_i32_0 = arith.constant 0 : i32
    return %1, %c0_i32 : i32, i32
  }
  func.func @transform_1(%arg0: i32, %arg1: i32) -> (i32, i32) {
    %c1_i32 = arith.constant 1 : i32
    %0 = arith.muli %arg0, %c1_i32 : i32
    %1 = arith.addi %0, %arg1 : i32
    %c0_i32 = arith.constant 0 : i32
    %c0_i32_0 = arith.constant 0 : i32
    return %1, %c0_i32 : i32, i32
  }
  func.func @transform_2(%arg0: i32, %arg1: i32) -> (i32, i32) {
    %c0_i32 = arith.constant 0 : i32
    %c0_i32_0 = arith.constant 0 : i32
    return %arg0, %c0_i32 : i32, i32
  }
}

</mosaic_0001>

<llo_original>
// kernel: tpu_custom_call.1
$region0: #{tpu_custom_call.1}
  #allocation0 [shape = 'u32[]', space=smem, size = 0x4, offset = 0x4, fixed_abs, tag = 'smem constant byte address 0x4 - core index']
  #allocation1 [shape = 'u32[144,128]{1,0:T(1,128)}', space=vmem, size = 0x12000, scoped, tag = 'internal scratch']
  #allocation2 [shape = 'f32[16,128]{1,0:T(8,128)}', space=vmem, size = 0x2000, scoped, tag = 'scratch operand']
  %s0 = inlined_call_operand.hbm [shape: f32[16,128], index: 0, kind: input, shape index: {}]
  %s1 = inlined_call_operand.hbm [shape: f32[16,128], index: 1, kind: input, shape index: {}]
  %s2 = inlined_call_operand.hbm [shape: f32[1,128], index: 2, kind: output, shape index: {}]
  %s3 = sld [smem:[#allocation0]]
  $region34: #{tpu_custom_call.1} parent=0
    _
  %s5 = ssub.s32 1, %s3
  %s6 = scalar_select 0, %s5, %s3
  $region1: #{tpu_custom_call.1} parent=0
    #allocation3 [shape = 'u8[8192]{0}', space=vmem, size = 0x2000, scoped, tag = 'input window, operand 0, single buffered']
    #allocation4 [shape = 's32[1]{0}', space=sflag, size = 0x4, scoped, tag = 'scoped memory for tpu_custom_call.1']
    #allocation5 [shape = 's32[1]{0}', space=sflag, size = 0x4, scoped, tag = 'scoped memory for tpu_custom_call.1']
    #allocation6 [shape = 'u8[8192]{0}', space=vmem, size = 0x2000, scoped, tag = 'input window, operand 1, single buffered']
    #allocation7 [shape = 's32[1]{0}', space=sflag, size = 0x4, scoped, tag = 'scoped memory for tpu_custom_call.1']
    #allocation8 [shape = 'u8[512]{0}', space=vmem, size = 0x400, scoped, tag = 'output window, operand 0, single buffered']
    %7 = vsyncpa [#allocation4], 0
    %8 = vsyncpa [#allocation7], 0
    %9 = vsyncpa [#allocation5], 0
    // Predicated region
    $region2: #{tpu_custom_call.1} parent=1 // pred_check
      _
    $region3: #{tpu_custom_call.1} parent=1 // pred_check_branch
      %11 = sbr.rel (0) target = $region5
    $region4: #{tpu_custom_call.1} parent=1 // pred_region
      %s12 = sadd.s32 0, 0
      %s13 = smul.u32 2, %s12
      %s15 = ssub.s32 256, 256
      %16 = vsyncadd [#allocation4], %s15
      %s17 = smul.addr %s13, 128
      %s18 = scalar_lea.hbm %s0, %s17
      %s19 = sshll.u32 [#allocation3], 4
      %s20 = int_to_ptr.vmem [resolvable:$true] %s19
      %25 = dma.hbm_to_vmem [thread:$0]  %s18, 256, %s20, [#allocation4], 128, 128, 8
    $region5: #{tpu_custom_call.1} parent=1 // pred_fallthru
      _
    // Predicated region
    $region6: #{tpu_custom_call.1} parent=1 // pred_check
      _
    $region7: #{tpu_custom_call.1} parent=1 // pred_check_branch
      %27 = sbr.rel (0) target = $region9
    $region8: #{tpu_custom_call.1} parent=1 // pred_region
      %s28 = sadd.s32 0, 0
      %s29 = smul.u32 2, %s28
      %s31 = ssub.s32 256, 256
      %32 = vsyncadd [#allocation7], %s31
      %s33 = smul.addr %s29, 128
      %s34 = scalar_lea.hbm %s1, %s33
      %s35 = sshll.u32 [#allocation6], 4
      %s36 = int_to_ptr.vmem [resolvable:$true] %s35
      %41 = dma.hbm_to_vmem [thread:$0]  %s34, 256, %s36, [#allocation7], 128, 128, 8
    $region9: #{tpu_custom_call.1} parent=1 // pred_fallthru
      _
    // Predicated region
    $region10: #{tpu_custom_call.1} parent=1 // pred_check
      _
    $region11: #{tpu_custom_call.1} parent=1 // pred_check_branch
      %43 = sbr.rel (0) target = $region13
    $region12: #{tpu_custom_call.1} parent=1 // pred_region
      %44 = dma.done [#allocation4], 256
    $region13: #{tpu_custom_call.1} parent=1 // pred_fallthru
      _
    // Predicated region
    $region14: #{tpu_custom_call.1} parent=1 // pred_check
      _
    $region15: #{tpu_custom_call.1} parent=1 // pred_check_branch
      %46 = sbr.rel (0) target = $region17
    $region16: #{tpu_custom_call.1} parent=1 // pred_region
      %47 = dma.done [#allocation7], 256
    $region17: #{tpu_custom_call.1} parent=1 // pred_fallthru
      _
    %s48 = sadd.s32 0, 0
    %s49 = smul.u32 2, %s48
    %s50 = sadd.s32 0, 0
    %s51 = smul.u32 2, %s50
    %p52 = scmp.eq.s32.totalorder 0, 0
    // Predicated region
    $region18: #{tpu_custom_call.1} parent=1 // pred_check
      %p53 = pneg %p52
    $region19: #{tpu_custom_call.1} parent=1 // pred_check_branch
      %55 = sbr.rel (%p53) target = $region21
    $region20: #{tpu_custom_call.1} parent=1 // pred_region
      %56 = vst [vmem:[#allocation2] sm:$0xff] 0.0
      %57 = vst [vmem:[#allocation2 + $0x8] sm:$0xff] 0.0
    $region21: #{tpu_custom_call.1} parent=1 // pred_fallthru
      _
    %v58 = vld [vmem:[#allocation3] sm:$0xff]
    %v59 = vld [vmem:[#allocation3 + $0x8] sm:$0xff]
    %v60 = vld [vmem:[#allocation6] sm:$0xff]
    %v61 = vld [vmem:[#allocation6 + $0x8] sm:$0xff]
    %v62 = vsub.f32 %v58, %v60
    %v63 = vsub.f32 %v59, %v61
    %v64 = vand.u32 2147483647, %v62
    %v65 = vand.u32 2147483647, %v63
    %v66 = vmin.f32 %v64, 1.0
    %v67 = vmin.f32 %v65, 1.0
    %v68 = vmul.f32 %v66, 0.5
    %v69 = vmul.f32 %v67, 0.5
    %v70 = vsub.f32 %v64, %v68
    %v71 = vsub.f32 %v65, %v69
    %v72 = vmul.f32 %v66, %v70
    %v73 = vmul.f32 %v67, %v71
    %v74 = vld [vmem:[#allocation2] sm:$0xff]
    %v75 = vld [vmem:[#allocation2 + $0x8] sm:$0xff]
    %v76 = vadd.f32 %v72, 0.0
    %v77 = vadd.f32 %v73, 0.0
    %v78 = vadd.f32 %v74, %v76
    %v79 = vadd.f32 %v75, %v77
    %80 = vst [vmem:[#allocation2] sm:$0xff] %v78
    %81 = vst [vmem:[#allocation2 + $0x8] sm:$0xff] %v79
    // Predicated region
    $region22: #{tpu_custom_call.1} parent=1 // pred_check
      %p82 = pneg %p52
    $region23: #{tpu_custom_call.1} parent=1 // pred_check_branch
      %84 = sbr.rel (%p82) target = $region25
    $region24: #{tpu_custom_call.1} parent=1 // pred_region
      %v85 = vld [vmem:[#allocation2] sm:$0xff]
      %v86 = vld [vmem:[#allocation2 + $0x8] sm:$0xff]
      %v87 = vadd.f32 %v85, %v86
      %v88 = vrot.slane %v87, 4
      %v89 = vadd.f32 %v87, %v88
      %v90 = vrot.slane %v89, 2
      %v91 = vadd.f32 %v89, %v90
      %v92 = vrot.slane %v91, 1
      %v93 = vadd.f32 %v91, %v92
      %94 = vst [vmem:[#allocation8] sm:$0x1] %v93
    $region25: #{tpu_custom_call.1} parent=1 // pred_fallthru
      _
    // Predicated region
    $region26: #{tpu_custom_call.1} parent=1 // pred_check
      _
    $region27: #{tpu_custom_call.1} parent=1 // pred_check_branch
      %96 = sbr.rel (0) target = $region29
    $region28: #{tpu_custom_call.1} parent=1 // pred_region
      %s98 = ssub.s32 16, 16
      %99 = vsyncadd [#allocation5], %s98
      %s101 = sshll.u32 [#allocation8], 4
      %s102 = int_to_ptr.vmem [resolvable:$true] %s101
      %104 = dma.vmem_to_hbm [thread:$0]  %s102, 16, %s2, [#allocation5]
    $region29: #{tpu_custom_call.1} parent=1 // pred_fallthru
      _
    // Predicated region
    $region30: #{tpu_custom_call.1} parent=1 // pred_check
      _
    $region31: #{tpu_custom_call.1} parent=1 // pred_check_branch
      %106 = sbr.rel (0) target = $region33
    $region32: #{tpu_custom_call.1} parent=1 // pred_region
      %107 = dma.done [#allocation5], 16
    $region33: #{tpu_custom_call.1} parent=1 // pred_fallthru
      _
    %108 = vsyncpa [#allocation4], 1
    %109 = vsyncpa [#allocation7], 1
    %110 = vsyncpa [#allocation5], 1

</llo_original>
